<compile_context>
chip_gen: v6e
topology: v6e:2x2x1
jax: 0.10.0
libtpu: 0.0.40
codegen_flags: <defaults>
</compile_context>

<pallas_src>
import jax
import jax.numpy as jnp
from jax.experimental import pallas as pl
from jax.experimental.pallas import tpu as pltpu


def _round_up(x, m):
    return ((x + m - 1) // m) * m


def _gelu_exact_f32(x):
    # nn.GELU default = exact erf formulation; done in f32.
    return 0.5 * x * (1.0 + jax.lax.erf(x * 0.7071067811865476))


def ffn_kernel(x_ref, w0_ref, b0_ref, w1_ref, b1_ref, o_ref, acc_ref):
    # x_ref:  (tm, D)     w0_ref: (D, th)   b0_ref: (1, th)
    # w1_ref: (th, O)     b1_ref: (1, O)    o_ref:  (tm, O)
    # acc_ref: (tm, O) f32 scratch, resident across the H-chunk loop.
    hk = pl.program_id(1)

    @pl.when(hk == 0)
    def _():
        acc_ref[...] = jnp.zeros_like(acc_ref)

    # fc0 chunk on the MXU, f32 accumulation; bias + GELU in f32 on the VPU/EUP.
    h = jnp.dot(x_ref[...], w0_ref[...], preferred_element_type=jnp.float32)
    h = h + b0_ref[...].astype(jnp.float32)
    h = _gelu_exact_f32(h)

    # fc1 chunk: accumulate the partial product of this H slab.
    acc_ref[...] += jnp.dot(h.astype(w1_ref.dtype), w1_ref[...],
                            preferred_element_type=jnp.float32)

    @pl.when(hk == pl.num_programs(1) - 1)
    def _():
        # Dropout with p=0.0 is the identity -> no-op.
        o_ref[...] = (acc_ref[...] + b1_ref[...].astype(jnp.float32)
                      ).astype(o_ref.dtype)


def _choose_tiles(M, D, H, O, in_isize, tm_req, th_req, budget_bytes):
    """Pick (tm, th) such that the double-buffered working set fits budget."""
    tm = _round_up(max(1, min(tm_req, M)), 8)

    def pick_th(th_cand):
        if H % 128 == 0:
            th = max(128, (min(th_cand, H) // 128) * 128)
            while H % th != 0:
                th -= 128
            return th
        return H  # full-dim block (last-dim = full array extent is always legal)

    th = pick_th(th_req)

    def working_set(tm, th):
        two = 2  # double buffering for pipelined inputs/outputs
        return (two * (tm * D * in_isize            # x tile
                       + D * th * in_isize          # W0 slab
                       + th * 4                     # b0 slab (f32)
                       + th * O * in_isize          # W1 slab
                       + O * 4                      # b1 (f32)
                       + tm * O * in_isize)         # out tile
                + tm * O * 4)                       # f32 accumulator

    # Shrink th, then tm, until we fit.
    while working_set(tm, th) > budget_bytes and H % 128 == 0 and th > 128:
        th = pick_th(th // 2)
        if working_set(tm, th) <= budget_bytes:
            break
    while working_set(tm, th) > budget_bytes and tm > 8:
        tm = _round_up(max(8, tm // 2), 8)

    return tm, th, working_set(tm, th)


def ffn_pallas(x2d, w0, b0, w1, b1, *, tm=256, th=512, compute_dtype=None,
               vmem_budget_bytes=40 * 1024 * 1024):
    M, D = x2d.shape
    Dw, H = w0.shape
    Hw, O = w1.shape
    assert D == Dw and H == Hw and O == b1.shape[1] and H == b0.shape[1]

    out_dtype = x2d.dtype
    if compute_dtype is not None:
        # bf16 matmul inputs; biases stay f32, accumulation stays f32.
        x2d = x2d.astype(compute_dtype)
        w0 = w0.astype(compute_dtype)
        w1 = w1.astype(compute_dtype)
    b0 = b0.astype(jnp.float32)
    b1 = b1.astype(jnp.float32)

    in_isize = jnp.dtype(x2d.dtype).itemsize
    tm, th, ws_bytes = _choose_tiles(M, D, H, O, in_isize, tm, th,
                                     vmem_budget_bytes)

    M_pad = _round_up(M, tm)
    if M_pad != M:
        x2d = jnp.pad(x2d, ((0, M_pad - M), (0, 0)))

    grid_m = M_pad // tm
    grid_h = H // th
    grid = (grid_m, grid_h)

    itemsize = lambda a: jnp.dtype(a.dtype).itemsize
    cost = pl.CostEstimate(
        flops=2 * M_pad * H * (D + O),
        transcendentals=M_pad * H,  # erf per hidden activation
        bytes_accessed=int(
            x2d.size * itemsize(x2d)
            + grid_m * (w0.size * itemsize(w0) + w1.size * itemsize(w1))
            + b0.size * itemsize(b0) + b1.size * itemsize(b1)
            + M_pad * O * jnp.dtype(out_dtype).itemsize),
    )

    # Leave headroom above the measured working set; stay below v7x's 64 MiB.
    vmem_limit = int(min(max(ws_bytes + (4 << 20), 32 << 20), 60 << 20))

    out = pl.pallas_call(
        ffn_kernel,
        out_shape=jax.ShapeDtypeStruct((M_pad, O), out_dtype),
        grid_spec=pltpu.PrefetchScalarGridSpec(
            num_scalar_prefetch=0,
            grid=grid,
            in_specs=[
                pl.BlockSpec((tm, D), lambda i, k: (i, 0)),   # x tile (not re-DMA'd over k)
                pl.BlockSpec((D, th), lambda i, k: (0, k)),   # W0 H-slab
                pl.BlockSpec((1, th), lambda i, k: (0, k)),   # b0 H-slab
                pl.BlockSpec((th, O), lambda i, k: (k, 0)),   # W1 H-slab
                pl.BlockSpec((1, O), lambda i, k: (0, 0)),    # b1
            ],
            out_specs=pl.BlockSpec((tm, O), lambda i, k: (i, 0)),
            scratch_shapes=[pltpu.VMEM((tm, O), jnp.float32)],
        ),
        compiler_params=pltpu.CompilerParams(
            dimension_semantics=("parallel", "arbitrary"),
            vmem_limit_bytes=vmem_limit,
        ),
        cost_estimate=cost,
    )(x2d, w0, b0, w1, b1)

    return out[:M] if M_pad != M else out


def ffn_forward(x, params, *, compute_dtype=None, tm=256, th=512):
    """x: (B, S, D) -> (B, S, out_features)."""
    w0, b0, w1, b1 = params
    B, S, D = x.shape
    O = w1.shape[1]
    x2d = x.reshape(B * S, D)
    out2d = ffn_pallas(x2d, w0, b0, w1, b1, tm=tm, th=th,
                       compute_dtype=compute_dtype)
    return out2d.reshape(B, S, O)


def init_ffn_params(key, in_features, hidden_features, out_features,
                    dtype=jnp.float32):
    k0, k1, k2, k3 = jax.random.split(key, 4)
    # Deterministic synthetic init (uniform, like PyTorch's fan-in bound).
    bound0 = 1.0 / jnp.sqrt(in_features)
    bound1 = 1.0 / jnp.sqrt(hidden_features)
    w0 = jax.random.uniform(k0, (in_features, hidden_features),
                            minval=-bound0, maxval=bound0, dtype=dtype)
    b0 = jax.random.uniform(k1, (1, hidden_features),
                            minval=-bound0, maxval=bound0, dtype=dtype)
    w1 = jax.random.uniform(k2, (hidden_features, out_features),
                            minval=-bound1, maxval=bound1, dtype=dtype)
    b1 = jax.random.uniform(k3, (1, out_features),
                            minval=-bound1, maxval=bound1, dtype=dtype)
    return w0, b0, w1, b1


if __name__ == "__main__":
    # Small but lane/MXU-aligned shapes: M = B*S = 128 (one 128-row tile),
    # H = 512 streamed as two 256-wide chunks, O = 128 (lane-dense output).
    B, S = 2, 64
    in_features, hidden_features, out_features = 128, 512, 128

    key = jax.random.PRNGKey(0)
    kx, kp = jax.random.split(key)
    x = jax.random.normal(kx, (B, S, in_features), dtype=jnp.float32)
    params = init_ffn_params(kp, in_features, hidden_features, out_features)

    # Pure-JAX reference (exact erf GELU, matching nn.GELU default).
    w0, b0, w1, b1 = params
    h = x.reshape(-1, in_features) @ w0 + b0
    h = 0.5 * h * (1.0 + jax.lax.erf(h / jnp.sqrt(2.0)))
    ref = (h @ w1 + b1).reshape(B, S, out_features)

    # f32 path: strict parity with the PyTorch module semantics.
    out_f32 = jax.block_until_ready(
        ffn_forward(x, params, tm=128, th=256))
    assert out_f32.shape == ref.shape
    assert jnp.allclose(out_f32, ref, atol=1e-5, rtol=1e-5), "f32 mismatch"

    # bf16 fast path (MXU-friendly): f32 accumulation, looser tolerance.
    out_bf16 = jax.block_until_ready(
        ffn_forward(x, params, compute_dtype=jnp.bfloat16, tm=128, th=256))
    assert jnp.allclose(out_bf16.astype(jnp.float32), ref,
                        atol=1e-1, rtol=5e-2), "bf16 mismatch"

    # Ragged-M path (M not a multiple of the tile -> padded then sliced).
    x_odd = x[:, :37, :]
    ref_odd = ref[:, :37, :]  # FFN is row-wise, so slicing the ref is exact.
    out_odd = jax.block_until_ready(
        ffn_forward(x_odd, params, tm=128, th=256))
    assert jnp.allclose(out_odd, ref_odd, atol=1e-5, rtol=1e-5), "ragged mismatch"

    print("KERNEL_OK")
</pallas_src>

<mosaic_0001>
module attributes {stable_mosaic.version = 11 : i64} {
  func.func @ffn_kernel(%arg0: i32, %arg1: i32, %arg2: memref<128x128xf32, #tpu.memory_space<vmem>>, %arg3: memref<128x256xf32, #tpu.memory_space<vmem>>, %arg4: memref<1x256xf32, #tpu.memory_space<vmem>>, %arg5: memref<256x128xf32, #tpu.memory_space<vmem>>, %arg6: memref<1x128xf32, #tpu.memory_space<vmem>>, %arg7: memref<128x128xf32, #tpu.memory_space<vmem>>, %arg8: memref<128x128xf32, #tpu.memory_space<vmem>>) attributes {dimension_semantics = [#tpu.dimension_semantics<parallel>, #tpu.dimension_semantics<arbitrary>], iteration_bounds = array<i64: 1, 2>, scalar_prefetch = 0 : i64, scratch_operands = 1 : i64, tpu.core_type = #tpu.core_type<tc>, window_params = [{transform_indices = @transform_0, window_bounds = array<i64: 128, 128>}, {transform_indices = @transform_1, window_bounds = array<i64: 128, 256>}, {transform_indices = @transform_2, window_bounds = array<i64: 1, 256>}, {transform_indices = @transform_3, window_bounds = array<i64: 256, 128>}, {pipeline_mode = #tpu.pipeline_mode<synchronous>, transform_indices = @transform_4, window_bounds = array<i64: 1, 128>}, {transform_indices = @transform_5, window_bounds = array<i64: 128, 128>}]} {
    %c0_i32 = arith.constant 0 : i32
    %0 = arith.cmpi eq, %arg1, %c0_i32 : i32
    %1 = arith.extui %0 : i1 to i32
    %c0_i32_0 = arith.constant 0 : i32
    %2 = arith.cmpi ne, %1, %c0_i32_0 : i32
    scf.if %2 {
      %cst_17 = arith.constant 0.000000e+00 : f32
      %25 = vector.broadcast %cst_17 : f32 to vector<128x128xf32>
      %c0_18 = arith.constant 0 : index
      %c0_19 = arith.constant 0 : index
      %26 = vector.load %arg8[%c0_18, %c0_19] : memref<128x128xf32, #tpu.memory_space<vmem>>, vector<128x128xf32>
      tpu.vector_store %arg8[%c0_18, %c0_19], %25 {strides = array<i32>} : memref<128x128xf32, #tpu.memory_space<vmem>>, vector<128x128xf32>,
    } else {
    }
    %c0 = arith.constant 0 : index
    %c0_1 = arith.constant 0 : index
    %3 = vector.load %arg2[%c0, %c0_1] : memref<128x128xf32, #tpu.memory_space<vmem>>, vector<128x128xf32>
    %c0_2 = arith.constant 0 : index
    %c0_3 = arith.constant 0 : index
    %4 = vector.load %arg3[%c0_2, %c0_3] : memref<128x256xf32, #tpu.memory_space<vmem>>, vector<128x256xf32>
    %cst = arith.constant dense<0.000000e+00> : vector<128x256xf32>
    %5 = tpu.matmul %3, %4, %cst {dimension_numbers = #tpu.dot_dimension_numbers<[1], [0], [0], [1], [0, 0, 1, 1], [], []>} : vector<128x128xf32>, vector<128x256xf32>, vector<128x256xf32> -> vector<128x256xf32>
    %c0_4 = arith.constant 0 : index
    %c0_5 = arith.constant 0 : index
    %6 = vector.load %arg4[%c0_4, %c0_5] : memref<1x256xf32, #tpu.memory_space<vmem>>, vector<1x256xf32>
    %7 = vector.broadcast %6 : vector<1x256xf32> to vector<128x256xf32>
    %8 = arith.addf %5, %7 : vector<128x256xf32>
    %cst_6 = arith.constant 5.000000e-01 : f32
    %9 = vector.broadcast %cst_6 : f32 to vector<128x256xf32>
    %10 = arith.mulf %9, %8 : vector<128x256xf32>
    %cst_7 = arith.constant 0.707106769 : f32
    %11 = vector.broadcast %cst_7 : f32 to vector<128x256xf32>
    %12 = arith.mulf %8, %11 : vector<128x256xf32>
    %13 = math.erf %12 : vector<128x256xf32>
    %cst_8 = arith.constant 1.000000e+00 : f32
    %14 = vector.broadcast %cst_8 : f32 to vector<128x256xf32>
    %15 = arith.addf %14, %13 : vector<128x256xf32>
    %16 = arith.mulf %10, %15 : vector<128x256xf32>
    %c0_9 = arith.constant 0 : index
    %c0_10 = arith.constant 0 : index
    %17 = vector.load %arg8[%c0_9, %c0_10] : memref<128x128xf32, #tpu.memory_space<vmem>>, vector<128x128xf32>
    %c0_11 = arith.constant 0 : index
    %c0_12 = arith.constant 0 : index
    %18 = vector.load %arg5[%c0_11, %c0_12] : memref<256x128xf32, #tpu.memory_space<vmem>>, vector<256x128xf32>
    %cst_13 = arith.constant dense<0.000000e+00> : vector<128x128xf32>
    %19 = tpu.matmul %16, %18, %cst_13 {dimension_numbers = #tpu.dot_dimension_numbers<[1], [0], [0], [1], [0, 0, 1, 1], [], []>} : vector<128x256xf32>, vector<256x128xf32>, vector<128x128xf32> -> vector<128x128xf32>
    %20 = arith.addf %17, %19 : vector<128x128xf32>
    %c0_14 = arith.constant 0 : index
    %c0_15 = arith.constant 0 : index
    %21 = vector.load %arg8[%c0_14, %c0_15] : memref<128x128xf32, #tpu.memory_space<vmem>>, vector<128x128xf32>
    tpu.vector_store %arg8[%c0_14, %c0_15], %20 {strides = array<i32>} : memref<128x128xf32, #tpu.memory_space<vmem>>, vector<128x128xf32>,
    %c1_i32 = arith.constant 1 : i32
    %22 = arith.cmpi eq, %arg1, %c1_i32 : i32
    %23 = arith.extui %22 : i1 to i32
    %c0_i32_16 = arith.constant 0 : i32
    %24 = arith.cmpi ne, %23, %c0_i32_16 : i32
    scf.if %24 {
      %c0_17 = arith.constant 0 : index
      %c0_18 = arith.constant 0 : index
      %25 = vector.load %arg8[%c0_17, %c0_18] : memref<128x128xf32, #tpu.memory_space<vmem>>, vector<128x128xf32>
      %c0_19 = arith.constant 0 : index
      %c0_20 = arith.constant 0 : index
      %26 = vector.load %arg6[%c0_19, %c0_20] : memref<1x128xf32, #tpu.memory_space<vmem>>, vector<1x128xf32>
      %27 = vector.broadcast %26 : vector<1x128xf32> to vector<128x128xf32>
      %28 = arith.addf %25, %27 : vector<128x128xf32>
      %c0_21 = arith.constant 0 : index
      %c0_22 = arith.constant 0 : index
      %29 = vector.load %arg7[%c0_21, %c0_22] : memref<128x128xf32, #tpu.memory_space<vmem>>, vector<128x128xf32>
      tpu.vector_store %arg7[%c0_21, %c0_22], %28 {strides = array<i32>} : memref<128x128xf32, #tpu.memory_space<vmem>>, vector<128x128xf32>,
    } else {
    }
    return
  }
  func.func @transform_0(%arg0: i32, %arg1: i32) -> (i32, i32) {
    %c0_i32 = arith.constant 0 : i32
    %c0_i32_0 = arith.constant 0 : i32
    return %arg0, %c0_i32 : i32, i32
  }
  func.func @transform_1(%arg0: i32, %arg1: i32) -> (i32, i32) {
    %c0_i32 = arith.constant 0 : i32
    %c0_i32_0 = arith.constant 0 : i32
    return %c0_i32, %arg1 : i32, i32
  }
  func.func @transform_2(%arg0: i32, %arg1: i32) -> (i32, i32) {
    %c0_i32 = arith.constant 0 : i32
    %c0_i32_0 = arith.constant 0 : i32
    return %c0_i32, %arg1 : i32, i32
  }
  func.func @transform_3(%arg0: i32, %arg1: i32) -> (i32, i32) {
    %c0_i32 = arith.constant 0 : i32
    %c0_i32_0 = arith.constant 0 : i32
    return %arg1, %c0_i32 : i32, i32
  }
  func.func @transform_4(%arg0: i32, %arg1: i32) -> (i32, i32) {
    %c0_i32 = arith.constant 0 : i32
    %c0_i32_0 = arith.constant 0 : i32
    %c0_i32_1 = arith.constant 0 : i32
    return %c0_i32, %c0_i32_0 : i32, i32
  }
  func.func @transform_5(%arg0: i32, %arg1: i32) -> (i32, i32) {
    %c0_i32 = arith.constant 0 : i32
    %c0_i32_0 = arith.constant 0 : i32
    return %arg0, %c0_i32 : i32, i32
  }
}

</mosaic_0001>

<llo_original>
// kernel: tpu_custom_call.1
$region0: #{tpu_custom_call.1}
  #allocation0 [shape = 'u32[]', space=smem, size = 0x4, offset = 0x4, fixed_abs, tag = 'smem constant byte address 0x4 - core index']
  #allocation1 [shape = 'u32[144,128]{1,0:T(1,128)}', space=vmem, size = 0x12000, scoped, tag = 'internal scratch']
  #allocation2 [shape = 'f32[128,128]{1,0:T(8,128)}', space=vmem, size = 0x10000, scoped, tag = 'scratch operand']
  %s0 = inlined_call_operand.hbm [shape: f32[128,128], index: 0, kind: input, shape index: {}]
  %s1 = inlined_call_operand.hbm [shape: f32[128,512], index: 1, kind: input, shape index: {}]
  %s2 = inlined_call_operand.hbm [shape: f32[1,512], index: 2, kind: input, shape index: {}]
  %s3 = inlined_call_operand.hbm [shape: f32[512,128], index: 3, kind: input, shape index: {}]
  %s4 = inlined_call_operand.vmem [shape: f32[1,128], index: 4, kind: input, shape index: {}]
  %s5 = inlined_call_operand.hbm [shape: f32[128,128], index: 5, kind: output, shape index: {}]
  %s6 = sld [smem:[#allocation0]]
  $region77: #{tpu_custom_call.1} parent=0
    _
  %s8 = ssub.s32 1, %s6
  %s9 = scalar_select 0, %s8, %s6
  $region1: #{tpu_custom_call.1} parent=0
    #allocation3 [shape = 'u8[65536]{0}', space=vmem, size = 0x10000, scoped, tag = 'input window, operand 0, single buffered']
    #allocation4 [shape = 's32[2]{0}', space=sflag, size = 0x8, scoped, tag = 'scoped memory for tpu_custom_call.1']
    #allocation5 [shape = 's32[2]{0}', space=sflag, size = 0x8, scoped, tag = 'scoped memory for tpu_custom_call.1']
    #allocation6 [shape = 'u8[262144]{0}', space=vmem, size = 0x40000, scoped, tag = 'input window, operand 1']
    #allocation7 [shape = 's32[2]{0}', space=sflag, size = 0x8, scoped, tag = 'scoped memory for tpu_custom_call.1']
    #allocation8 [shape = 'u8[2048]{0}', space=vmem, size = 0x800, scoped, tag = 'input window, operand 2']
    #allocation9 [shape = 'u8[262144]{0}', space=vmem, size = 0x40000, scoped, tag = 'input window, operand 3']
    #allocation10 [shape = 's32[2]{0}', space=sflag, size = 0x8, scoped, tag = 'scoped memory for tpu_custom_call.1']
    #allocation11 [shape = 'u8[65536]{0}', space=vmem, size = 0x10000, scoped, tag = 'output window, operand 0, single buffered']
    %10 = vsyncpa [#allocation4], 0
    %11 = vsyncpa [#allocation7], 0
    %s12 = scalar_lea.sflag [#allocation7], 1
    %13 = vsyncpa %s12, 0
    %14 = vsyncpa [#allocation10], 0
    %s15 = scalar_lea.sflag [#allocation10], 1
    %16 = vsyncpa %s15, 0
    %17 = vsyncpa [#allocation5], 0
    loop: start=0, step=1, limit=4
    $region2: #{tpu_custom_call.1} parent=1 // loop_pre_header
      _
    $region3: #{tpu_custom_call.1} parent=1 // loop_header
      %s19 = sphi 0, %s23
      %p20 = scmp.ge.s32.totalorder %s19, 4
      %s26 = sphi 0, %s38
      %s27 = sphi 0, %s34
      %s28 = sphi 0, %s26
      %s29 = sphi 0, %s27
      %s30 = sphi 0, %s28
      %s31 = sphi 0, %s29
      %s41 = sphi 0, %s43
      %s44 = sphi 0, %s41
      %s45 = sphi 0, %s44
      %s61 = sphi 0, %s45
      %s67 = sphi 0, %s69
      %s70 = sphi 0, %s67
      %s71 = sphi 0, %s70
      %s87 = sphi 0, %s71
      %s93 = sphi 0, %s95
      %s96 = sphi 0, %s93
      %s97 = sphi 0, %s96
      %s113 = sphi 0, %s97
      %s119 = sphi 0, %s121
      %s122 = sphi 0, %s119
      %s123 = sphi 0, %s122
      %s139 = sphi 0, %s123
      %s143 = sphi 0, %s143
      %s145 = sphi 0, %s143
      %s146 = sphi 0, %s145
      %s160 = sphi 0, %s146
      %s166 = sphi 0, %s168
      %s169 = sphi 0, %s166
      %s170 = sphi 0, %s169
      %s186 = sphi 0, %s170
    $region4: #{tpu_custom_call.1} parent=1 // loop_header_branch
      %22 = sbr.rel (%p20) target = $region8
    $region5: #{tpu_custom_call.1} parent=1 // loop_body
      %s24 = ssub.s32 %s19, 1
      %s25 = ssub.s32 %s19, 2
      %s32 = sadd.s32 1, %s27
      %p33 = scmp.ge.s32.totalorder %s32, 2
      %s34 = scalar_select %p33, 0, %s32
      %s35 = sadd.s32 1, %s26
      %s36 = scalar_select %p33, %s35, %s26
      %p37 = scmp.ge.s32.totalorder %s36, 1
      %s38 = scalar_select %p37, 0, %s36
      %s39 = ssub.s32 %s26, %s38
      %p40 = scmp.eq.s32.totalorder %s39, 0
      %s42 = sadd.s32 %s41, 1
      %s43 = scalar_select %p40, %s41, %s42
      %p46 = pneg %p40
      %p47 = scmp.eq.s32.totalorder %s19, 1
      %p48 = por %p46, %p47
      %p49 = scmp.ne.s32.totalorder %s41, %s44
      %p50 = scmp.eq.s32.totalorder %s19, 0
      %p51 = por %p49, %p50
      %p52 = scmp.ne.s32.totalorder %s41, %s44
      %p53 = scmp.eq.s32.totalorder %s24, 1
      %p54 = por %p52, %p53
      %p55 = scmp.ne.s32.totalorder %s44, %s45
      %p56 = scmp.eq.s32.totalorder %s24, 0
      %p57 = por %p55, %p56
      %p58 = scmp.ne.s32.totalorder %s44, %s45
      %p59 = scmp.eq.s32.totalorder %s25, 1
      %p60 = por %p58, %p59
      %p62 = scmp.ne.s32.totalorder %s45, %s61
      %p63 = scmp.eq.s32.totalorder %s25, 0
      %p64 = por %p62, %p63
      %s65 = ssub.s32 %s27, %s34
      %p66 = scmp.eq.s32.totalorder %s65, 0
      %s68 = sadd.s32 %s67, 1
      %s69 = scalar_select %p66, %s67, %s68
      %p72 = pneg %p66
      %p73 = scmp.eq.s32.totalorder %s19, 1
      %p74 = por %p72, %p73
      %p75 = scmp.ne.s32.totalorder %s67, %s70
      %p76 = scmp.eq.s32.totalorder %s19, 0
      %p77 = por %p75, %p76
      %p78 = scmp.ne.s32.totalorder %s67, %s70
      %p79 = scmp.eq.s32.totalorder %s24, 1
      %p80 = por %p78, %p79
      %p81 = scmp.ne.s32.totalorder %s70, %s71
      %p82 = scmp.eq.s32.totalorder %s24, 0
      %p83 = por %p81, %p82
      %p84 = scmp.ne.s32.totalorder %s70, %s71
      %p85 = scmp.eq.s32.totalorder %s25, 1
      %p86 = por %p84, %p85
      %p88 = scmp.ne.s32.totalorder %s71, %s87
      %p89 = scmp.eq.s32.totalorder %s25, 0
      %p90 = por %p88, %p89
      %s91 = ssub.s32 %s27, %s34
      %p92 = scmp.eq.s32.totalorder %s91, 0
      %s94 = sadd.s32 %s93, 1
      %s95 = scalar_select %p92, %s93, %s94
      %p98 = pneg %p92
      %p99 = scmp.eq.s32.totalorder %s19, 1
      %p100 = por %p98, %p99
      %p101 = scmp.ne.s32.totalorder %s93, %s96
      %p102 = scmp.eq.s32.totalorder %s19, 0
      %p103 = por %p101, %p102
      %p104 = scmp.ne.s32.totalorder %s93, %s96
      %p105 = scmp.eq.s32.totalorder %s24, 1
      %p106 = por %p104, %p105
      %p107 = scmp.ne.s32.totalorder %s96, %s97
      %p108 = scmp.eq.s32.totalorder %s24, 0
      %p109 = por %p107, %p108
      %p110 = scmp.ne.s32.totalorder %s96, %s97
      %p111 = scmp.eq.s32.totalorder %s25, 1
      %p112 = por %p110, %p111
      %p114 = scmp.ne.s32.totalorder %s97, %s113
      %p115 = scmp.eq.s32.totalorder %s25, 0
      %p116 = por %p114, %p115
      %s117 = ssub.s32 %s27, %s34
      %p118 = scmp.eq.s32.totalorder %s117, 0
      %s120 = sadd.s32 %s119, 1
      %s121 = scalar_select %p118, %s119, %s120
      %p124 = pneg %p118
      %p125 = scmp.eq.s32.totalorder %s19, 1
      %p126 = por %p124, %p125
      %p127 = scmp.ne.s32.totalorder %s119, %s122
      %p128 = scmp.eq.s32.totalorder %s19, 0
      %p129 = por %p127, %p128
      %p130 = scmp.ne.s32.totalorder %s119, %s122
      %p131 = scmp.eq.s32.totalorder %s24, 1
      %p132 = por %p130, %p131
      %p133 = scmp.ne.s32.totalorder %s122, %s123
      %p134 = scmp.eq.s32.totalorder %s24, 0
      %p135 = por %p133, %p134
      %p136 = scmp.ne.s32.totalorder %s122, %s123
      %p137 = scmp.eq.s32.totalorder %s25, 1
      %p138 = por %p136, %p137
      %p140 = scmp.ne.s32.totalorder %s123, %s139
      %p141 = scmp.eq.s32.totalorder %s25, 0
      %p142 = por %p140, %p141
      %s144 = sadd.s32 %s143, 1
      %p147 = scmp.eq.s32.totalorder %s19, 1
      %p148 = scmp.ne.s32.totalorder %s143, %s145
      %p149 = scmp.eq.s32.totalorder %s19, 0
      %p150 = por %p148, %p149
      %p151 = scmp.ne.s32.totalorder %s143, %s145
      %p152 = scmp.eq.s32.totalorder %s24, 1
      %p153 = por %p151, %p152
      %p154 = scmp.ne.s32.totalorder %s145, %s146
      %p155 = scmp.eq.s32.totalorder %s24, 0
      %p156 = por %p154, %p155
      %p157 = scmp.ne.s32.totalorder %s145, %s146
      %p158 = scmp.eq.s32.totalorder %s25, 1
      %p159 = por %p157, %p158
      %p161 = scmp.ne.s32.totalorder %s146, %s160
      %p162 = scmp.eq.s32.totalorder %s25, 0
      %p163 = por %p161, %p162
      %s164 = ssub.s32 %s26, %s38
      %p165 = scmp.eq.s32.totalorder %s164, 0
      %s167 = sadd.s32 %s166, 1
      %s168 = scalar_select %p165, %s166, %s167
      %p171 = pneg %p165
      %p172 = scmp.eq.s32.totalorder %s19, 1
      %p173 = por %p171, %p172
      %p174 = scmp.ne.s32.totalorder %s166, %s169
      %p175 = scmp.eq.s32.totalorder %s19, 0
      %p176 = por %p174, %p175
      %p177 = scmp.ne.s32.totalorder %s166, %s169
      %p178 = scmp.eq.s32.totalorder %s24, 1
      %p179 = por %p177, %p178
      %p180 = scmp.ne.s32.totalorder %s169, %s170
      %p181 = scmp.eq.s32.totalorder %s24, 0
      %p182 = por %p180, %p181
      %p183 = scmp.ne.s32.totalorder %s169, %s170
      %p184 = scmp.eq.s32.totalorder %s25, 1
      %p185 = por %p183, %p184
      %p187 = scmp.ne.s32.totalorder %s170, %s186
      %p188 = scmp.eq.s32.totalorder %s25, 0
      %p189 = por %p187, %p188
      %p190 = scmp.le.s32.totalorder 1, %s19
      %p191 = scmp.lt.s32.totalorder %s19, 3
      %p192 = pnand %p190, %p191
      %p193 = pneg %p192
      // Predicated region
      $region9: #{tpu_custom_call.1} parent=5 // pred_check
        _
      $region10: #{tpu_custom_call.1} parent=5 // pred_check_branch
        %195 = sbr.rel (%p192) target = $region12
      $region11: #{tpu_custom_call.1} parent=5 // pred_region
        %s196 = ssub.s32 %s19, 1
        // Predicated region
        $region13: #{tpu_custom_call.1} parent=11 // pred_check
          %p197 = pneg %p57
        $region14: #{tpu_custom_call.1} parent=11 // pred_check_branch
          %199 = sbr.rel (%p197) target = $region16
        $region15: #{tpu_custom_call.1} parent=11 // pred_region
          %s200 = smul.u32 16, %s28
          %s202 = ssub.s32 2048, 2048
          %203 = vsyncadd [#allocation4], %s202
          %s204 = smul.addr %s200, 128
          %s205 = scalar_lea.hbm %s0, %s204
          %s206 = sshll.u32 [#allocation3], 4
          %s207 = int_to_ptr.vmem [resolvable:$true] %s206
          %212 = dma.hbm_to_vmem [thread:$0]  %s205, 2048, %s207, [#allocation4], 128, 128, 8
        $region16: #{tpu_custom_call.1} parent=11 // pred_fallthru
          _
        // Predicated region
        $region17: #{tpu_custom_call.1} parent=11 // pred_check
          %p213 = pneg %p156
        $region18: #{tpu_custom_call.1} parent=11 // pred_check_branch
          %215 = sbr.rel (%p213) target = $region20
        $region19: #{tpu_custom_call.1} parent=11 // pred_region
          _
        $region20: #{tpu_custom_call.1} parent=11 // pred_fallthru
          _
      $region12: #{tpu_custom_call.1} parent=5 // pred_fallthru
        _
      %p216 = scmp.lt.s32.totalorder %s19, 2
      // Predicated region
      $region21: #{tpu_custom_call.1} parent=5 // pred_check
        %p217 = pneg %p216
      $region22: #{tpu_custom_call.1} parent=5 // pred_check_branch
        %219 = sbr.rel (%p217) target = $region24
      $region23: #{tpu_custom_call.1} parent=5 // pred_region
        // Predicated region
        $region25: #{tpu_custom_call.1} parent=23 // pred_check
          %p220 = pneg %p77
        $region26: #{tpu_custom_call.1} parent=23 // pred_check_branch
          %222 = sbr.rel (%p220) target = $region28
        $region27: #{tpu_custom_call.1} parent=23 // pred_region
          %s223 = sand.u32 %s19, 1
          %s224 = scalar_lea.sflag [#allocation7], %s223
          %s225 = sand.u32 %s67, 1
          %s226 = smul.addr %s225, 256
          %s227 = scalar_lea.vmem [#allocation6], %s226
          %s228 = smul.u32 2, %s27
          %s230 = ssub.s32 4096, 4096
          %231 = vsyncadd %s224, %s230
          %s232 = smul.addr %s228, 128
          %s233 = scalar_lea.hbm %s1, %s232
          %s234 = sshll.u32 %s227, 4
          %s235 = int_to_ptr.vmem [resolvable:$true] %s234
          %240 = dma.hbm_to_vmem [thread:$0]  %s233, 4096, %s235, %s224, 512, 256, 16
        $region28: #{tpu_custom_call.1} parent=23 // pred_fallthru
          _
        // Predicated region
        $region29: #{tpu_custom_call.1} parent=23 // pred_check
          %p241 = pneg %p103
        $region30: #{tpu_custom_call.1} parent=23 // pred_check_branch
          %243 = sbr.rel (%p241) target = $region32
        $region31: #{tpu_custom_call.1} parent=23 // pred_region
          %s244 = sand.u32 %s19, 1
          %s245 = scalar_lea.sflag [#allocation7], %s244
          %s246 = sand.u32 %s93, 1
          %s247 = smul.addr %s246, 2
          %s248 = scalar_lea.vmem [#allocation8], %s247
          %s249 = smul.u32 2, %s27
          %s251 = ssub.s32 32, 32
          %252 = vsyncadd %s245, %s251
          %s253 = smul.addr %s249, 16
          %s254 = scalar_lea.hbm %s2, %s253
          %s256 = sshll.u32 %s248, 4
          %s257 = int_to_ptr.vmem [resolvable:$true] %s256
          %259 = dma.hbm_to_vmem [thread:$0]  %s254, 32, %s257, %s245
        $region32: #{tpu_custom_call.1} parent=23 // pred_fallthru
          _
        // Predicated region
        $region33: #{tpu_custom_call.1} parent=23 // pred_check
          %p260 = pneg %p129
        $region34: #{tpu_custom_call.1} parent=23 // pred_check_branch
          %262 = sbr.rel (%p260) target = $region36
        $region35: #{tpu_custom_call.1} parent=23 // pred_region
          %s263 = sand.u32 %s119, 1
          %s264 = scalar_lea.sflag [#allocation10], %s263
          %s265 = sand.u32 %s119, 1
          %s266 = smul.addr %s265, 256
          %s267 = scalar_lea.vmem [#allocation9], %s266
          %s268 = smul.u32 32, %s27
          %s270 = ssub.s32 4096, 4096
          %271 = vsyncadd %s264, %s270
          %s272 = smul.addr %s268, 128
          %s273 = scalar_lea.hbm %s3, %s272
          %s274 = sshll.u32 %s267, 4
          %s275 = int_to_ptr.vmem [resolvable:$true] %s274
          %280 = dma.hbm_to_vmem [thread:$0]  %s273, 4096, %s275, %s264, 128, 128, 8
        $region36: #{tpu_custom_call.1} parent=23 // pred_fallthru
          _
      $region24: #{tpu_custom_call.1} parent=5 // pred_fallthru
        _
      %p281 = scmp.le.s32.totalorder 1, %s19
      %p282 = scmp.lt.s32.totalorder %s19, 3
      %p283 = pnand %p281, %p282
      %p284 = pneg %p283
      // Predicated region
      $region37: #{tpu_custom_call.1} parent=5 // pred_check
        _
      $region38: #{tpu_custom_call.1} parent=5 // pred_check_branch
        %286 = sbr.rel (%p283) target = $region40
      $region39: #{tpu_custom_call.1} parent=5 // pred_region
        %s287 = ssub.s32 %s19, 1
        // Predicated region
        $region41: #{tpu_custom_call.1} parent=39 // pred_check
          %p288 = pneg %p57
        $region42: #{tpu_custom_call.1} parent=39 // pred_check_branch
          %290 = sbr.rel (%p288) target = $region44
        $region43: #{tpu_custom_call.1} parent=39 // pred_region
          %291 = dma.done [#allocation4], 2048
        $region44: #{tpu_custom_call.1} parent=39 // pred_fallthru
          _
        %s292 = sand.u32 %s24, 1
        %s293 = scalar_lea.sflag [#allocation7], %s292
        %s294 = sand.u32 %s70, 1
        %s295 = smul.addr %s294, 256
        %s296 = scalar_lea.vmem [#allocation6], %s295
        // Predicated region
        $region45: #{tpu_custom_call.1} parent=39 // pred_check
          %p297 = pneg %p83
        $region46: #{tpu_custom_call.1} parent=39 // pred_check_branch
          %299 = sbr.rel (%p297) target = $region48
        $region47: #{tpu_custom_call.1} parent=39 // pred_region
          %300 = dma.done %s293, 4096
        $region48: #{tpu_custom_call.1} parent=39 // pred_fallthru
          _
        %s301 = sand.u32 %s24, 1
        %s302 = scalar_lea.sflag [#allocation7], %s301
        %s303 = sand.u32 %s96, 1
        %s304 = smul.addr %s303, 2
        %s305 = scalar_lea.vmem [#allocation8], %s304
        // Predicated region
        $region49: #{tpu_custom_call.1} parent=39 // pred_check
          %p306 = pneg %p109
        $region50: #{tpu_custom_call.1} parent=39 // pred_check_branch
          %308 = sbr.rel (%p306) target = $region52
        $region51: #{tpu_custom_call.1} parent=39 // pred_region
          %309 = dma.done %s302, 32
        $region52: #{tpu_custom_call.1} parent=39 // pred_fallthru
          _
        %s310 = sand.u32 %s122, 1
        %s311 = scalar_lea.sflag [#allocation10], %s310
        %s312 = sand.u32 %s122, 1
        %s313 = smul.addr %s312, 256
        %s314 = scalar_lea.vmem [#allocation9], %s313
        // Predicated region
        $region53: #{tpu_custom_call.1} parent=39 // pred_check
          %p315 = pneg %p135
        $region54: #{tpu_custom_call.1} parent=39 // pred_check_branch
          %317 = sbr.rel (%p315) target = $region56
        $region55: #{tpu_custom_call.1} parent=39 // pred_region
          %318 = dma.done %s311, 4096
        $region56: #{tpu_custom_call.1} parent=39 // pred_fallthru
          _
        %p319 = pneg %p57
        %p320 = pneg %p54
        %s321 = sand.u32 %s24, 1
        %s322 = scalar_lea.sflag [#allocation7], %s321
        %s323 = sand.u32 %s70, 1
        %s324 = smul.addr %s323, 256
        %s325 = scalar_lea.vmem [#allocation6], %s324
        %p326 = pneg %p83
        %p327 = pneg %p80
        %s328 = sand.u32 %s24, 1
        %s329 = scalar_lea.sflag [#allocation7], %s328
        %s330 = sand.u32 %s96, 1
        %s331 = smul.addr %s330, 2
        %s332 = scalar_lea.vmem [#allocation8], %s331
        %p333 = pneg %p109
        %p334 = pneg %p106
        %s335 = sand.u32 %s122, 1
        %s336 = scalar_lea.sflag [#allocation10], %s335
        %s337 = sand.u32 %s122, 1
        %s338 = smul.addr %s337, 256
        %s339 = scalar_lea.vmem [#allocation9], %s338
        %p340 = pneg %p135
        %p341 = pneg %p132
        %p342 = pneg %p156
        %p343 = pneg %p153
        %p344 = pneg %p182
        %p345 = pneg %p179
        %s346 = smul.u32 16, %s28
        %s347 = smul.u32 2, %s29
        %s348 = smul.u32 2, %s29
        %s349 = smul.u32 32, %s29
        %s350 = smul.u32 16, %s28
        %p351 = scmp.eq.s32.totalorder %s29, 0
        // Predicated region
        $region57: #{tpu_custom_call.1} parent=39 // pred_check
          %p352 = pneg %p351
        $region58: #{tpu_custom_call.1} parent=39 // pred_check_branch
          %354 = sbr.rel (%p352) target = $region60
        $region59: #{tpu_custom_call.1} parent=39 // pred_region
          %355 = vst [vmem:[#allocation2] sm:$0xff] 0.0
          %356 = vst [vmem:[#allocation2 + $0x8] sm:$0xff] 0.0
          %357 = vst [vmem:[#allocation2 + $0x10] sm:$0xff] 0.0
          %358 = vst [vmem:[#allocation2 + $0x18] sm:$0xff] 0.0
          %359 = vst [vmem:[#allocation2 + $0x20] sm:$0xff] 0.0
          %360 = vst [vmem:[#allocation2 + $0x28] sm:$0xff] 0.0
          %361 = vst [vmem:[#allocation2 + $0x30] sm:$0xff] 0.0
          %362 = vst [vmem:[#allocation2 + $0x38] sm:$0xff] 0.0
          %363 = vst [vmem:[#allocation2 + $0x40] sm:$0xff] 0.0
          %364 = vst [vmem:[#allocation2 + $0x48] sm:$0xff] 0.0
          %365 = vst [vmem:[#allocation2 + $0x50] sm:$0xff] 0.0
          %366 = vst [vmem:[#allocation2 + $0x58] sm:$0xff] 0.0
          %367 = vst [vmem:[#allocation2 + $0x60] sm:$0xff] 0.0
          %368 = vst [vmem:[#allocation2 + $0x68] sm:$0xff] 0.0
          %369 = vst [vmem:[#allocation2 + $0x70] sm:$0xff] 0.0
          %370 = vst [vmem:[#allocation2 + $0x78] sm:$0xff] 0.0
        $region60: #{tpu_custom_call.1} parent=39 // pred_fallthru
          _
        %v371 = vld [vmem:[#allocation3] sm:$0xff]
        %v372 = vld [vmem:[#allocation3 + $0x8] sm:$0xff]
        %v373 = vld [vmem:[#allocation3 + $0x10] sm:$0xff]
        %v374 = vld [vmem:[#allocation3 + $0x18] sm:$0xff]
        %v375 = vld [vmem:[#allocation3 + $0x20] sm:$0xff]
        %v376 = vld [vmem:[#allocation3 + $0x28] sm:$0xff]
        %v377 = vld [vmem:[#allocation3 + $0x30] sm:$0xff]
        %v378 = vld [vmem:[#allocation3 + $0x38] sm:$0xff]
        %v379 = vld [vmem:[#allocation3 + $0x40] sm:$0xff]
        %v380 = vld [vmem:[#allocation3 + $0x48] sm:$0xff]
        %v381 = vld [vmem:[#allocation3 + $0x50] sm:$0xff]
        %v382 = vld [vmem:[#allocation3 + $0x58] sm:$0xff]
        %v383 = vld [vmem:[#allocation3 + $0x60] sm:$0xff]
        %v384 = vld [vmem:[#allocation3 + $0x68] sm:$0xff]
        %v385 = vld [vmem:[#allocation3 + $0x70] sm:$0xff]
        %v386 = vld [vmem:[#allocation3 + $0x78] sm:$0xff]
        %v387 = vld [vmem:[%s296] sm:$0xff]
        %v388 = vld [vmem:[%s296 + $0x8] sm:$0xff]
        %v389 = vld [vmem:[%s296 + $0x10] sm:$0xff]
        %v390 = vld [vmem:[%s296 + $0x18] sm:$0xff]
        %v391 = vld [vmem:[%s296 + $0x20] sm:$0xff]
        %v392 = vld [vmem:[%s296 + $0x28] sm:$0xff]
        %v393 = vld [vmem:[%s296 + $0x30] sm:$0xff]
        %v394 = vld [vmem:[%s296 + $0x38] sm:$0xff]
        %v395 = vld [vmem:[%s296 + $0x40] sm:$0xff]
        %v396 = vld [vmem:[%s296 + $0x48] sm:$0xff]
        %v397 = vld [vmem:[%s296 + $0x50] sm:$0xff]
        %v398 = vld [vmem:[%s296 + $0x58] sm:$0xff]
        %v399 = vld [vmem:[%s296 + $0x60] sm:$0xff]
        %v400 = vld [vmem:[%s296 + $0x68] sm:$0xff]
        %v401 = vld [vmem:[%s296 + $0x70] sm:$0xff]
        %v402 = vld [vmem:[%s296 + $0x78] sm:$0xff]
        %v403 = vld [vmem:[%s296 + $0x80] sm:$0xff]
        %v404 = vld [vmem:[%s296 + $0x88] sm:$0xff]
        %v405 = vld [vmem:[%s296 + $0x90] sm:$0xff]
        %v406 = vld [vmem:[%s296 + $0x98] sm:$0xff]
        %v407 = vld [vmem:[%s296 + $0xa0] sm:$0xff]
        %v408 = vld [vmem:[%s296 + $0xa8] sm:$0xff]
        %v409 = vld [vmem:[%s296 + $0xb0] sm:$0xff]
        %v410 = vld [vmem:[%s296 + $0xb8] sm:$0xff]
        %v411 = vld [vmem:[%s296 + $0xc0] sm:$0xff]
        %v412 = vld [vmem:[%s296 + $0xc8] sm:$0xff]
        %v413 = vld [vmem:[%s296 + $0xd0] sm:$0xff]
        %v414 = vld [vmem:[%s296 + $0xd8] sm:$0xff]
        %v415 = vld [vmem:[%s296 + $0xe0] sm:$0xff]
        %v416 = vld [vmem:[%s296 + $0xe8] sm:$0xff]
        %v417 = vld [vmem:[%s296 + $0xf0] sm:$0xff]
        %v418 = vld [vmem:[%s296 + $0xf8] sm:$0xff]
        %v419 = vld [vmem:[%s305] sm:$0x3]
        %v421 = vlaneseq
        %v422 = vshrl.u32 %v421, 7
        %v423 = vsub.s32 0, %v422
        %v424 = vrot.slane %v419, %v423
        %v425 = vlaneseq
        %v426 = vshrl.u32 %v425, 7
        %v427 = vsub.s32 1, %v426
        %v428 = vrot.slane %v419, %v427
        %431 = vmatprep.subr.mxu0 %v418
        %432 = vmatpush1.msra.mxu0 %v417
        %433 = vmatprep.subr.mxu0 %v416
        %434 = vmatpush1.msra.mxu0 %v415
        %435 = vmatprep.subr.mxu0 %v414
        %436 = vmatpush1.msra.mxu0 %v413
        %437 = vmatprep.subr.mxu0 %v412
        %438 = vmatpush1.msra.mxu0 %v411
        %439 = vmatprep.subr.mxu0 %v410
        %440 = vmatpush1.msra.mxu0 %v409
        %441 = vmatprep.subr.mxu0 %v408
        %442 = vmatpush1.msra.mxu0 %v407
        %443 = vmatprep.subr.mxu0 %v406
        %444 = vmatpush1.msra.mxu0 %v405
        %445 = vmatprep.subr.mxu0 %v404
        %446 = vmatpush1.msra.mxu0 %v403
        %447 = vmatprep.subr.mxu0 %v402
        %448 = vmatpush1.msra.mxu0 %v401
        %449 = vmatprep.subr.mxu0 %v400
        %450 = vmatpush1.msra.mxu0 %v399
        %451 = vmatprep.subr.mxu0 %v398
        %452 = vmatpush1.msra.mxu0 %v397
        %453 = vmatprep.subr.mxu0 %v396
        %454 = vmatpush1.msra.mxu0 %v395
        %455 = vmatprep.subr.mxu0 %v394
        %456 = vmatpush1.msra.mxu0 %v393
        %457 = vmatprep.subr.mxu0 %v392
        %458 = vmatpush1.msra.mxu0 %v391
        %459 = vmatprep.subr.mxu0 %v390
        %460 = vmatpush1.msra.mxu0 %v389
        %461 = vmatprep.subr.mxu0 %v388
        %462 = vmatpush1.msra.mxu0 %v387
        %463 = vmatprep.subr.mxu0 0.0
        %464 = vmatpush2.msra.mxu0 0.0
        %465 = vmatprep.subr.mxu0 0.0
        %466 = vmatpush2.msra.mxu0 0.0
        %467 = vmatprep.subr.mxu0 0.0
        %468 = vmatpush2.msra.mxu0 0.0
        %469 = vmatprep.subr.mxu0 0.0
        %470 = vmatpush2.msra.mxu0 0.0
        %471 = vmatprep.subr.mxu0 0.0
        %472 = vmatpush2.msra.mxu0 0.0
        %473 = vmatprep.subr.mxu0 0.0
        %474 = vmatpush2.msra.mxu0 0.0
        %475 = vmatprep.subr.mxu0 0.0
        %476 = vmatpush2.msra.mxu0 0.0
        %477 = vmatprep.subr.mxu0 0.0
        %478 = vmatpush2.msra.mxu0 0.0
        %479 = vmatprep.subr.mxu0 0.0
        %480 = vmatpush2.msra.mxu0 0.0
        %481 = vmatprep.subr.mxu0 0.0
        %482 = vmatpush2.msra.mxu0 0.0
        %483 = vmatprep.subr.mxu0 0.0
        %484 = vmatpush2.msra.mxu0 0.0
        %485 = vmatprep.subr.mxu0 0.0
        %486 = vmatpush2.msra.mxu0 0.0
        %487 = vmatprep.subr.mxu0 0.0
        %488 = vmatpush2.msra.mxu0 0.0
        %489 = vmatprep.subr.mxu0 0.0
        %490 = vmatpush2.msra.mxu0 0.0
        %491 = vmatprep.subr.mxu0 0.0
        %492 = vmatpush2.msra.mxu0 0.0
        %493 = vmatprep.subr.mxu0 0.0
        %494 = vmatpush2.msra.mxu0 0.0
        %495 = vmatprep.mubr.f32.mxu0 0.0
        %496 = vmatmul.mubr.f32.gmra.mxu0 %v371
        %v497 = vpop.f32.mrf.mxu0
        %v498 = vadd.f32 %v424, %v497
        %v499 = vpop.f32.mrf.mxu0
        %v500 = vadd.f32 %v428, %v499
        %501 = vmatprep.mubr.f32.mxu0 0.0
        %502 = vmatmul.mubr.f32.gmra.mxu0 %v372
        %v503 = vpop.f32.mrf.mxu0
        %v504 = vadd.f32 %v424, %v503
        %v505 = vpop.f32.mrf.mxu0
        %v506 = vadd.f32 %v428, %v505
        %507 = vmatprep.mubr.f32.mxu0 0.0
        %508 = vmatmul.mubr.f32.gmra.mxu0 %v373
        %v509 = vpop.f32.mrf.mxu0
        %v510 = vadd.f32 %v424, %v509
        %v511 = vpop.f32.mrf.mxu0
        %v512 = vadd.f32 %v428, %v511
        %513 = vmatprep.mubr.f32.mxu0 0.0
        %514 = vmatmul.mubr.f32.gmra.mxu0 %v374
        %v515 = vpop.f32.mrf.mxu0
        %v516 = vadd.f32 %v424, %v515
        %v517 = vpop.f32.mrf.mxu0
        %v518 = vadd.f32 %v428, %v517
        %519 = vmatprep.mubr.f32.mxu0 0.0
        %520 = vmatmul.mubr.f32.gmra.mxu0 %v375
        %v521 = vpop.f32.mrf.mxu0
        %v522 = vadd.f32 %v424, %v521
        %v523 = vpop.f32.mrf.mxu0
        %v524 = vadd.f32 %v428, %v523
        %525 = vmatprep.mubr.f32.mxu0 0.0
        %526 = vmatmul.mubr.f32.gmra.mxu0 %v376
        %v527 = vpop.f32.mrf.mxu0
        %v528 = vadd.f32 %v424, %v527
        %v529 = vpop.f32.mrf.mxu0
        %v530 = vadd.f32 %v428, %v529
        %531 = vmatprep.mubr.f32.mxu0 0.0
        %532 = vmatmul.mubr.f32.gmra.mxu0 %v377
        %v533 = vpop.f32.mrf.mxu0
        %v534 = vadd.f32 %v424, %v533
        %v535 = vpop.f32.mrf.mxu0
        %v536 = vadd.f32 %v428, %v535
        %537 = vmatprep.mubr.f32.mxu0 0.0
        %538 = vmatmul.mubr.f32.gmra.mxu0 %v378
        %v539 = vpop.f32.mrf.mxu0
        %v540 = vadd.f32 %v424, %v539
        %v541 = vpop.f32.mrf.mxu0
        %v542 = vadd.f32 %v428, %v541
        %543 = vmatprep.mubr.f32.mxu0 0.0
        %544 = vmatmul.mubr.f32.gmra.mxu0 %v379
        %v545 = vpop.f32.mrf.mxu0
        %v546 = vadd.f32 %v424, %v545
        %v547 = vpop.f32.mrf.mxu0
        %v548 = vadd.f32 %v428, %v547
        %549 = vmatprep.mubr.f32.mxu0 0.0
        %550 = vmatmul.mubr.f32.gmra.mxu0 %v380
        %v551 = vpop.f32.mrf.mxu0
        %v552 = vadd.f32 %v424, %v551
        %v553 = vpop.f32.mrf.mxu0
        %v554 = vadd.f32 %v428, %v553
        %555 = vmatprep.mubr.f32.mxu0 0.0
        %556 = vmatmul.mubr.f32.gmra.mxu0 %v381
        %v557 = vpop.f32.mrf.mxu0
        %v558 = vadd.f32 %v424, %v557
        %v559 = vpop.f32.mrf.mxu0
        %v560 = vadd.f32 %v428, %v559
        %561 = vmatprep.mubr.f32.mxu0 0.0
        %562 = vmatmul.mubr.f32.gmra.mxu0 %v382
        %v563 = vpop.f32.mrf.mxu0
        %v564 = vadd.f32 %v424, %v563
        %v565 = vpop.f32.mrf.mxu0
        %v566 = vadd.f32 %v428, %v565
        %567 = vmatprep.mubr.f32.mxu0 0.0
        %568 = vmatmul.mubr.f32.gmra.mxu0 %v383
        %v569 = vpop.f32.mrf.mxu0
        %v570 = vadd.f32 %v424, %v569
        %v571 = vpop.f32.mrf.mxu0
        %v572 = vadd.f32 %v428, %v571
        %573 = vmatprep.mubr.f32.mxu0 0.0
        %574 = vmatmul.mubr.f32.gmra.mxu0 %v384
        %v575 = vpop.f32.mrf.mxu0
        %v576 = vadd.f32 %v424, %v575
        %v577 = vpop.f32.mrf.mxu0
        %v578 = vadd.f32 %v428, %v577
        %579 = vmatprep.mubr.f32.mxu0 0.0
        %580 = vmatmul.mubr.f32.gmra.mxu0 %v385
        %v581 = vpop.f32.mrf.mxu0
        %v582 = vadd.f32 %v424, %v581
        %v583 = vpop.f32.mrf.mxu0
        %v584 = vadd.f32 %v428, %v583
        %585 = vmatprep.mubr.f32.mxu0 0.0
        %586 = vmatmul.mubr.f32.gmra.mxu0 %v386
        %v587 = vpop.f32.mrf.mxu0
        %v588 = vadd.f32 %v424, %v587
        %v589 = vpop.f32.mrf.mxu0
        %v590 = vadd.f32 %v428, %v589
        %591 = vdwg.mxu0
        %v592 = vmul.f32 %v498, 0.5
        %v593 = vmul.f32 %v500, 0.5
        %v594 = vmul.f32 %v504, 0.5
        %v595 = vmul.f32 %v506, 0.5
        %v596 = vmul.f32 %v510, 0.5
        %v597 = vmul.f32 %v512, 0.5
        %v598 = vmul.f32 %v516, 0.5
        %v599 = vmul.f32 %v518, 0.5
        %v600 = vmul.f32 %v522, 0.5
        %v601 = vmul.f32 %v524, 0.5
        %v602 = vmul.f32 %v528, 0.5
        %v603 = vmul.f32 %v530, 0.5
        %v604 = vmul.f32 %v534, 0.5
        %v605 = vmul.f32 %v536, 0.5
        %v606 = vmul.f32 %v540, 0.5
        %v607 = vmul.f32 %v542, 0.5
        %v608 = vmul.f32 %v546, 0.5
        %v609 = vmul.f32 %v548, 0.5
        %v610 = vmul.f32 %v552, 0.5
        %v611 = vmul.f32 %v554, 0.5
        %v612 = vmul.f32 %v558, 0.5
        %v613 = vmul.f32 %v560, 0.5
        %v614 = vmul.f32 %v564, 0.5
        %v615 = vmul.f32 %v566, 0.5
        %v616 = vmul.f32 %v570, 0.5
        %v617 = vmul.f32 %v572, 0.5
        %v618 = vmul.f32 %v576, 0.5
        %v619 = vmul.f32 %v578, 0.5
        %v620 = vmul.f32 %v582, 0.5
        %v621 = vmul.f32 %v584, 0.5
        %v622 = vmul.f32 %v588, 0.5
        %v623 = vmul.f32 %v590, 0.5
        %v624 = vmul.f32 %v498, 0.70710677
        %v625 = vmul.f32 %v500, 0.70710677
        %v626 = vmul.f32 %v504, 0.70710677
        %v627 = vmul.f32 %v506, 0.70710677
        %v628 = vmul.f32 %v510, 0.70710677
        %v629 = vmul.f32 %v512, 0.70710677
        %v630 = vmul.f32 %v516, 0.70710677
        %v631 = vmul.f32 %v518, 0.70710677
        %v632 = vmul.f32 %v522, 0.70710677
        %v633 = vmul.f32 %v524, 0.70710677
        %v634 = vmul.f32 %v528, 0.70710677
        %v635 = vmul.f32 %v530, 0.70710677
        %v636 = vmul.f32 %v534, 0.70710677
        %v637 = vmul.f32 %v536, 0.70710677
        %v638 = vmul.f32 %v540, 0.70710677
        %v639 = vmul.f32 %v542, 0.70710677
        %v640 = vmul.f32 %v546, 0.70710677
        %v641 = vmul.f32 %v548, 0.70710677
        %v642 = vmul.f32 %v552, 0.70710677
        %v643 = vmul.f32 %v554, 0.70710677
        %v644 = vmul.f32 %v558, 0.70710677
        %v645 = vmul.f32 %v560, 0.70710677
        %v646 = vmul.f32 %v564, 0.70710677
        %v647 = vmul.f32 %v566, 0.70710677
        %v648 = vmul.f32 %v570, 0.70710677
        %v649 = vmul.f32 %v572, 0.70710677
        %v650 = vmul.f32 %v576, 0.70710677
        %v651 = vmul.f32 %v578, 0.70710677
        %v652 = vmul.f32 %v582, 0.70710677
        %v653 = vmul.f32 %v584, 0.70710677
        %v654 = vmul.f32 %v588, 0.70710677
        %v655 = vmul.f32 %v590, 0.70710677
        %v656 = verf.f32.pop %v624
        %v657 = verf.f32.pop %v625
        %v658 = verf.f32.pop %v626
        %v659 = verf.f32.pop %v627
        %v660 = verf.f32.pop %v628
        %v661 = verf.f32.pop %v629
        %v662 = verf.f32.pop %v630
        %v663 = verf.f32.pop %v631
        %v664 = verf.f32.pop %v632
        %v665 = verf.f32.pop %v633
        %v666 = verf.f32.pop %v634
        %v667 = verf.f32.pop %v635
        %v668 = verf.f32.pop %v636
        %v669 = verf.f32.pop %v637
        %v670 = verf.f32.pop %v638
        %v671 = verf.f32.pop %v639
        %v672 = verf.f32.pop %v640
        %v673 = verf.f32.pop %v641
        %v674 = verf.f32.pop %v642
        %v675 = verf.f32.pop %v643
        %v676 = verf.f32.pop %v644
        %v677 = verf.f32.pop %v645
        %v678 = verf.f32.pop %v646
        %v679 = verf.f32.pop %v647
        %v680 = verf.f32.pop %v648
        %v681 = verf.f32.pop %v649
        %v682 = verf.f32.pop %v650
        %v683 = verf.f32.pop %v651
        %v684 = verf.f32.pop %v652
        %v685 = verf.f32.pop %v653
        %v686 = verf.f32.pop %v654
        %v687 = verf.f32.pop %v655
        %v688 = vadd.f32 %v656, 1.0
        %v689 = vadd.f32 %v657, 1.0
        %v690 = vadd.f32 %v658, 1.0
        %v691 = vadd.f32 %v659, 1.0
        %v692 = vadd.f32 %v660, 1.0
        %v693 = vadd.f32 %v661, 1.0
        %v694 = vadd.f32 %v662, 1.0
        %v695 = vadd.f32 %v663, 1.0
        %v696 = vadd.f32 %v664, 1.0
        %v697 = vadd.f32 %v665, 1.0
        %v698 = vadd.f32 %v666, 1.0
        %v699 = vadd.f32 %v667, 1.0
        %v700 = vadd.f32 %v668, 1.0
        %v701 = vadd.f32 %v669, 1.0
        %v702 = vadd.f32 %v670, 1.0
        %v703 = vadd.f32 %v671, 1.0
        %v704 = vadd.f32 %v672, 1.0
        %v705 = vadd.f32 %v673, 1.0
        %v706 = vadd.f32 %v674, 1.0
        %v707 = vadd.f32 %v675, 1.0
        %v708 = vadd.f32 %v676, 1.0
        %v709 = vadd.f32 %v677, 1.0
        %v710 = vadd.f32 %v678, 1.0
        %v711 = vadd.f32 %v679, 1.0
        %v712 = vadd.f32 %v680, 1.0
        %v713 = vadd.f32 %v681, 1.0
        %v714 = vadd.f32 %v682, 1.0
        %v715 = vadd.f32 %v683, 1.0
        %v716 = vadd.f32 %v684, 1.0
        %v717 = vadd.f32 %v685, 1.0
        %v718 = vadd.f32 %v686, 1.0
        %v719 = vadd.f32 %v687, 1.0
        %v720 = vmul.f32 %v592, %v688
        %v721 = vmul.f32 %v593, %v689
        %v722 = vmul.f32 %v594, %v690
        %v723 = vmul.f32 %v595, %v691
        %v724 = vmul.f32 %v596, %v692
        %v725 = vmul.f32 %v597, %v693
        %v726 = vmul.f32 %v598, %v694
        %v727 = vmul.f32 %v599, %v695
        %v728 = vmul.f32 %v600, %v696
        %v729 = vmul.f32 %v601, %v697
        %v730 = vmul.f32 %v602, %v698
        %v731 = vmul.f32 %v603, %v699
        %v732 = vmul.f32 %v604, %v700
        %v733 = vmul.f32 %v605, %v701
        %v734 = vmul.f32 %v606, %v702
        %v735 = vmul.f32 %v607, %v703
        %v736 = vmul.f32 %v608, %v704
        %v737 = vmul.f32 %v609, %v705
        %v738 = vmul.f32 %v610, %v706
        %v739 = vmul.f32 %v611, %v707
        %v740 = vmul.f32 %v612, %v708
        %v741 = vmul.f32 %v613, %v709
        %v742 = vmul.f32 %v614, %v710
        %v743 = vmul.f32 %v615, %v711
        %v744 = vmul.f32 %v616, %v712
        %v745 = vmul.f32 %v617, %v713
        %v746 = vmul.f32 %v618, %v714
        %v747 = vmul.f32 %v619, %v715
        %v748 = vmul.f32 %v620, %v716
        %v749 = vmul.f32 %v621, %v717
        %v750 = vmul.f32 %v622, %v718
        %v751 = vmul.f32 %v623, %v719
        %v752 = vld [vmem:[#allocation2] sm:$0xff]
        %v753 = vld [vmem:[#allocation2 + $0x8] sm:$0xff]
        %v754 = vld [vmem:[#allocation2 + $0x10] sm:$0xff]
        %v755 = vld [vmem:[#allocation2 + $0x18] sm:$0xff]
        %v756 = vld [vmem:[#allocation2 + $0x20] sm:$0xff]
        %v757 = vld [vmem:[#allocation2 + $0x28] sm:$0xff]
        %v758 = vld [vmem:[#allocation2 + $0x30] sm:$0xff]
        %v759 = vld [vmem:[#allocation2 + $0x38] sm:$0xff]
        %v760 = vld [vmem:[#allocation2 + $0x40] sm:$0xff]
        %v761 = vld [vmem:[#allocation2 + $0x48] sm:$0xff]
        %v762 = vld [vmem:[#allocation2 + $0x50] sm:$0xff]
        %v763 = vld [vmem:[#allocation2 + $0x58] sm:$0xff]
        %v764 = vld [vmem:[#allocation2 + $0x60] sm:$0xff]
        %v765 = vld [vmem:[#allocation2 + $0x68] sm:$0xff]
        %v766 = vld [vmem:[#allocation2 + $0x70] sm:$0xff]
        %v767 = vld [vmem:[#allocation2 + $0x78] sm:$0xff]
        %v768 = vld [vmem:[%s314] sm:$0xff]
        %v769 = vld [vmem:[%s314 + $0x8] sm:$0xff]
        %v770 = vld [vmem:[%s314 + $0x10] sm:$0xff]
        %v771 = vld [vmem:[%s314 + $0x18] sm:$0xff]
        %v772 = vld [vmem:[%s314 + $0x20] sm:$0xff]
        %v773 = vld [vmem:[%s314 + $0x28] sm:$0xff]
        %v774 = vld [vmem:[%s314 + $0x30] sm:$0xff]
        %v775 = vld [vmem:[%s314 + $0x38] sm:$0xff]
        %v776 = vld [vmem:[%s314 + $0x40] sm:$0xff]
        %v777 = vld [vmem:[%s314 + $0x48] sm:$0xff]
        %v778 = vld [vmem:[%s314 + $0x50] sm:$0xff]
        %v779 = vld [vmem:[%s314 + $0x58] sm:$0xff]
        %v780 = vld [vmem:[%s314 + $0x60] sm:$0xff]
        %v781 = vld [vmem:[%s314 + $0x68] sm:$0xff]
        %v782 = vld [vmem:[%s314 + $0x70] sm:$0xff]
        %v783 = vld [vmem:[%s314 + $0x78] sm:$0xff]
        %v784 = vld [vmem:[%s314 + $0x80] sm:$0xff]
        %v785 = vld [vmem:[%s314 + $0x88] sm:$0xff]
        %v786 = vld [vmem:[%s314 + $0x90] sm:$0xff]
        %v787 = vld [vmem:[%s314 + $0x98] sm:$0xff]
        %v788 = vld [vmem:[%s314 + $0xa0] sm:$0xff]
        %v789 = vld [vmem:[%s314 + $0xa8] sm:$0xff]
        %v790 = vld [vmem:[%s314 + $0xb0] sm:$0xff]
        %v791 = vld [vmem:[%s314 + $0xb8] sm:$0xff]
        %v792 = vld [vmem:[%s314 + $0xc0] sm:$0xff]
        %v793 = vld [vmem:[%s314 + $0xc8] sm:$0xff]
        %v794 = vld [vmem:[%s314 + $0xd0] sm:$0xff]
        %v795 = vld [vmem:[%s314 + $0xd8] sm:$0xff]
        %v796 = vld [vmem:[%s314 + $0xe0] sm:$0xff]
        %v797 = vld [vmem:[%s314 + $0xe8] sm:$0xff]
        %v798 = vld [vmem:[%s314 + $0xf0] sm:$0xff]
        %v799 = vld [vmem:[%s314 + $0xf8] sm:$0xff]
        %800 = vmatprep.subr.mxu0 0.0
        %801 = vmatpush1.msra.mxu0 %v783
        %802 = vmatprep.subr.mxu0 0.0
        %803 = vmatpush1.msra.mxu0 %v782
        %804 = vmatprep.subr.mxu0 0.0
        %805 = vmatpush1.msra.mxu0 %v781
        %806 = vmatprep.subr.mxu0 0.0
        %807 = vmatpush1.msra.mxu0 %v780
        %808 = vmatprep.subr.mxu0 0.0
        %809 = vmatpush1.msra.mxu0 %v779
        %810 = vmatprep.subr.mxu0 0.0
        %811 = vmatpush1.msra.mxu0 %v778
        %812 = vmatprep.subr.mxu0 0.0
        %813 = vmatpush1.msra.mxu0 %v777
        %814 = vmatprep.subr.mxu0 0.0
        %815 = vmatpush1.msra.mxu0 %v776
        %816 = vmatprep.subr.mxu0 0.0
        %817 = vmatpush1.msra.mxu0 %v775
        %818 = vmatprep.subr.mxu0 0.0
        %819 = vmatpush1.msra.mxu0 %v774
        %820 = vmatprep.subr.mxu0 0.0
        %821 = vmatpush1.msra.mxu0 %v773
        %822 = vmatprep.subr.mxu0 0.0
        %823 = vmatpush1.msra.mxu0 %v772
        %824 = vmatprep.subr.mxu0 0.0
        %825 = vmatpush1.msra.mxu0 %v771
        %826 = vmatprep.subr.mxu0 0.0
        %827 = vmatpush1.msra.mxu0 %v770
        %828 = vmatprep.subr.mxu0 0.0
        %829 = vmatpush1.msra.mxu0 %v769
        %830 = vmatprep.subr.mxu0 0.0
        %831 = vmatpush1.msra.mxu0 %v768
        %832 = vmatprep.subr.mxu0 0.0
        %833 = vmatpush2.msra.mxu0 %v799
        %834 = vmatprep.subr.mxu0 0.0
        %835 = vmatpush2.msra.mxu0 %v798
        %836 = vmatprep.subr.mxu0 0.0
        %837 = vmatpush2.msra.mxu0 %v797
        %838 = vmatprep.subr.mxu0 0.0
        %839 = vmatpush2.msra.mxu0 %v796
        %840 = vmatprep.subr.mxu0 0.0
        %841 = vmatpush2.msra.mxu0 %v795
        %842 = vmatprep.subr.mxu0 0.0
        %843 = vmatpush2.msra.mxu0 %v794
        %844 = vmatprep.subr.mxu0 0.0
        %845 = vmatpush2.msra.mxu0 %v793
        %846 = vmatprep.subr.mxu0 0.0
        %847 = vmatpush2.msra.mxu0 %v792
        %848 = vmatprep.subr.mxu0 0.0
        %849 = vmatpush2.msra.mxu0 %v791
        %850 = vmatprep.subr.mxu0 0.0
        %851 = vmatpush2.msra.mxu0 %v790
        %852 = vmatprep.subr.mxu0 0.0
        %853 = vmatpush2.msra.mxu0 %v789
        %854 = vmatprep.subr.mxu0 0.0
        %855 = vmatpush2.msra.mxu0 %v788
        %856 = vmatprep.subr.mxu0 0.0
        %857 = vmatpush2.msra.mxu0 %v787
        %858 = vmatprep.subr.mxu0 0.0
        %859 = vmatpush2.msra.mxu0 %v786
        %860 = vmatprep.subr.mxu0 0.0
        %861 = vmatpush2.msra.mxu0 %v785
        %862 = vmatprep.subr.mxu0 0.0
        %863 = vmatpush2.msra.mxu0 %v784
        %864 = vmatprep.mubr.f32.mxu0 %v721
        %865 = vmatmul.mubr.f32.gmra.mxu0 %v720
        %v866 = vpop.f32.mrf.mxu0
        %v867 = vadd.f32 0.0, %v866
        %v868 = vpop.f32.mrf.mxu0
        %869 = vmatprep.mubr.f32.mxu0 %v723
        %870 = vmatmul.mubr.f32.gmra.mxu0 %v722
        %v871 = vpop.f32.mrf.mxu0
        %v872 = vadd.f32 0.0, %v871
        %v873 = vpop.f32.mrf.mxu0
        %874 = vmatprep.mubr.f32.mxu0 %v725
        %875 = vmatmul.mubr.f32.gmra.mxu0 %v724
        %v876 = vpop.f32.mrf.mxu0
        %v877 = vadd.f32 0.0, %v876
        %v878 = vpop.f32.mrf.mxu0
        %879 = vmatprep.mubr.f32.mxu0 %v727
        %880 = vmatmul.mubr.f32.gmra.mxu0 %v726
        %v881 = vpop.f32.mrf.mxu0
        %v882 = vadd.f32 0.0, %v881
        %v883 = vpop.f32.mrf.mxu0
        %884 = vmatprep.mubr.f32.mxu0 %v729
        %885 = vmatmul.mubr.f32.gmra.mxu0 %v728
        %v886 = vpop.f32.mrf.mxu0
        %v887 = vadd.f32 0.0, %v886
        %v888 = vpop.f32.mrf.mxu0
        %889 = vmatprep.mubr.f32.mxu0 %v731
        %890 = vmatmul.mubr.f32.gmra.mxu0 %v730
        %v891 = vpop.f32.mrf.mxu0
        %v892 = vadd.f32 0.0, %v891
        %v893 = vpop.f32.mrf.mxu0
        %894 = vmatprep.mubr.f32.mxu0 %v733
        %895 = vmatmul.mubr.f32.gmra.mxu0 %v732
        %v896 = vpop.f32.mrf.mxu0
        %v897 = vadd.f32 0.0, %v896
        %v898 = vpop.f32.mrf.mxu0
        %899 = vmatprep.mubr.f32.mxu0 %v735
        %900 = vmatmul.mubr.f32.gmra.mxu0 %v734
        %v901 = vpop.f32.mrf.mxu0
        %v902 = vadd.f32 0.0, %v901
        %v903 = vpop.f32.mrf.mxu0
        %904 = vmatprep.mubr.f32.mxu0 %v737
        %905 = vmatmul.mubr.f32.gmra.mxu0 %v736
        %v906 = vpop.f32.mrf.mxu0
        %v907 = vadd.f32 0.0, %v906
        %v908 = vpop.f32.mrf.mxu0
        %909 = vmatprep.mubr.f32.mxu0 %v739
        %910 = vmatmul.mubr.f32.gmra.mxu0 %v738
        %v911 = vpop.f32.mrf.mxu0
        %v912 = vadd.f32 0.0, %v911
        %v913 = vpop.f32.mrf.mxu0
        %914 = vmatprep.mubr.f32.mxu0 %v741
        %915 = vmatmul.mubr.f32.gmra.mxu0 %v740
        %v916 = vpop.f32.mrf.mxu0
        %v917 = vadd.f32 0.0, %v916
        %v918 = vpop.f32.mrf.mxu0
        %919 = vmatprep.mubr.f32.mxu0 %v743
        %920 = vmatmul.mubr.f32.gmra.mxu0 %v742
        %v921 = vpop.f32.mrf.mxu0
        %v922 = vadd.f32 0.0, %v921
        %v923 = vpop.f32.mrf.mxu0
        %924 = vmatprep.mubr.f32.mxu0 %v745
        %925 = vmatmul.mubr.f32.gmra.mxu0 %v744
        %v926 = vpop.f32.mrf.mxu0
        %v927 = vadd.f32 0.0, %v926
        %v928 = vpop.f32.mrf.mxu0
        %929 = vmatprep.mubr.f32.mxu0 %v747
        %930 = vmatmul.mubr.f32.gmra.mxu0 %v746
        %v931 = vpop.f32.mrf.mxu0
        %v932 = vadd.f32 0.0, %v931
        %v933 = vpop.f32.mrf.mxu0
        %934 = vmatprep.mubr.f32.mxu0 %v749
        %935 = vmatmul.mubr.f32.gmra.mxu0 %v748
        %v936 = vpop.f32.mrf.mxu0
        %v937 = vadd.f32 0.0, %v936
        %v938 = vpop.f32.mrf.mxu0
        %939 = vmatprep.mubr.f32.mxu0 %v751
        %940 = vmatmul.mubr.f32.gmra.mxu0 %v750
        %v941 = vpop.f32.mrf.mxu0
        %v942 = vadd.f32 0.0, %v941
        %v943 = vpop.f32.mrf.mxu0
        %944 = vdwg.mxu0
        %v945 = vadd.f32 %v752, %v867
        %v946 = vadd.f32 %v753, %v872
        %v947 = vadd.f32 %v754, %v877
        %v948 = vadd.f32 %v755, %v882
        %v949 = vadd.f32 %v756, %v887
        %v950 = vadd.f32 %v757, %v892
        %v951 = vadd.f32 %v758, %v897
        %v952 = vadd.f32 %v759, %v902
        %v953 = vadd.f32 %v760, %v907
        %v954 = vadd.f32 %v761, %v912
        %v955 = vadd.f32 %v762, %v917
        %v956 = vadd.f32 %v763, %v922
        %v957 = vadd.f32 %v764, %v927
        %v958 = vadd.f32 %v765, %v932
        %v959 = vadd.f32 %v766, %v937
        %v960 = vadd.f32 %v767, %v942
        %961 = vst [vmem:[#allocation2] sm:$0xff] %v945
        %962 = vst [vmem:[#allocation2 + $0x8] sm:$0xff] %v946
        %963 = vst [vmem:[#allocation2 + $0x10] sm:$0xff] %v947
        %964 = vst [vmem:[#allocation2 + $0x18] sm:$0xff] %v948
        %965 = vst [vmem:[#allocation2 + $0x20] sm:$0xff] %v949
        %966 = vst [vmem:[#allocation2 + $0x28] sm:$0xff] %v950
        %967 = vst [vmem:[#allocation2 + $0x30] sm:$0xff] %v951
        %968 = vst [vmem:[#allocation2 + $0x38] sm:$0xff] %v952
        %969 = vst [vmem:[#allocation2 + $0x40] sm:$0xff] %v953
        %970 = vst [vmem:[#allocation2 + $0x48] sm:$0xff] %v954
        %971 = vst [vmem:[#allocation2 + $0x50] sm:$0xff] %v955
        %972 = vst [vmem:[#allocation2 + $0x58] sm:$0xff] %v956
        %973 = vst [vmem:[#allocation2 + $0x60] sm:$0xff] %v957
        %974 = vst [vmem:[#allocation2 + $0x68] sm:$0xff] %v958
        %975 = vst [vmem:[#allocation2 + $0x70] sm:$0xff] %v959
        %976 = vst [vmem:[#allocation2 + $0x78] sm:$0xff] %v960
        %p977 = scmp.eq.s32.totalorder %s29, 1
        // Predicated region
        $region61: #{tpu_custom_call.1} parent=39 // pred_check
          %p978 = pneg %p977
        $region62: #{tpu_custom_call.1} parent=39 // pred_check_branch
          %980 = sbr.rel (%p978) target = $region64
        $region63: #{tpu_custom_call.1} parent=39 // pred_region
          %v981 = vld [vmem:[#allocation2] sm:$0xff]
          %v982 = vld [vmem:[#allocation2 + $0x8] sm:$0xff]
          %v983 = vld [vmem:[#allocation2 + $0x10] sm:$0xff]
          %v984 = vld [vmem:[#allocation2 + $0x18] sm:$0xff]
          %v985 = vld [vmem:[#allocation2 + $0x20] sm:$0xff]
          %v986 = vld [vmem:[#allocation2 + $0x28] sm:$0xff]
          %v987 = vld [vmem:[#allocation2 + $0x30] sm:$0xff]
          %v988 = vld [vmem:[#allocation2 + $0x38] sm:$0xff]
          %v989 = vld [vmem:[#allocation2 + $0x40] sm:$0xff]
          %v990 = vld [vmem:[#allocation2 + $0x48] sm:$0xff]
          %v991 = vld [vmem:[#allocation2 + $0x50] sm:$0xff]
          %v992 = vld [vmem:[#allocation2 + $0x58] sm:$0xff]
          %v993 = vld [vmem:[#allocation2 + $0x60] sm:$0xff]
          %v994 = vld [vmem:[#allocation2 + $0x68] sm:$0xff]
          %v995 = vld [vmem:[#allocation2 + $0x70] sm:$0xff]
          %v996 = vld [vmem:[#allocation2 + $0x78] sm:$0xff]
          %v997 = vld [vmem:[%s4] sm:$0x1]
          %v999 = vlaneseq
          %v1000 = vshrl.u32 %v999, 7
          %v1001 = vsub.s32 0, %v1000
          %v1002 = vrot.slane %v997, %v1001
          %v1004 = vadd.f32 %v981, %v1002
          %v1005 = vadd.f32 %v982, %v1002
          %v1006 = vadd.f32 %v983, %v1002
          %v1007 = vadd.f32 %v984, %v1002
          %v1008 = vadd.f32 %v985, %v1002
          %v1009 = vadd.f32 %v986, %v1002
          %v1010 = vadd.f32 %v987, %v1002
          %v1011 = vadd.f32 %v988, %v1002
          %v1012 = vadd.f32 %v989, %v1002
          %v1013 = vadd.f32 %v990, %v1002
          %v1014 = vadd.f32 %v991, %v1002
          %v1015 = vadd.f32 %v992, %v1002
          %v1016 = vadd.f32 %v993, %v1002
          %v1017 = vadd.f32 %v994, %v1002
          %v1018 = vadd.f32 %v995, %v1002
          %v1019 = vadd.f32 %v996, %v1002
          %1020 = vst [vmem:[#allocation11] sm:$0xff] %v1004
          %1021 = vst [vmem:[#allocation11 + $0x8] sm:$0xff] %v1005
          %1022 = vst [vmem:[#allocation11 + $0x10] sm:$0xff] %v1006
          %1023 = vst [vmem:[#allocation11 + $0x18] sm:$0xff] %v1007
          %1024 = vst [vmem:[#allocation11 + $0x20] sm:$0xff] %v1008
          %1025 = vst [vmem:[#allocation11 + $0x28] sm:$0xff] %v1009
          %1026 = vst [vmem:[#allocation11 + $0x30] sm:$0xff] %v1010
          %1027 = vst [vmem:[#allocation11 + $0x38] sm:$0xff] %v1011
          %1028 = vst [vmem:[#allocation11 + $0x40] sm:$0xff] %v1012
          %1029 = vst [vmem:[#allocation11 + $0x48] sm:$0xff] %v1013
          %1030 = vst [vmem:[#allocation11 + $0x50] sm:$0xff] %v1014
          %1031 = vst [vmem:[#allocation11 + $0x58] sm:$0xff] %v1015
          %1032 = vst [vmem:[#allocation11 + $0x60] sm:$0xff] %v1016
          %1033 = vst [vmem:[#allocation11 + $0x68] sm:$0xff] %v1017
          %1034 = vst [vmem:[#allocation11 + $0x70] sm:$0xff] %v1018
          %1035 = vst [vmem:[#allocation11 + $0x78] sm:$0xff] %v1019
        $region64: #{tpu_custom_call.1} parent=39 // pred_fallthru
          _
        // Predicated region
        $region65: #{tpu_custom_call.1} parent=39 // pred_check
          %p1036 = pneg %p179
        $region66: #{tpu_custom_call.1} parent=39 // pred_check_branch
          %1038 = sbr.rel (%p1036) target = $region68
        $region67: #{tpu_custom_call.1} parent=39 // pred_region
          %s1039 = smul.u32 16, %s28
          %s1041 = ssub.s32 2048, 2048
          %1042 = vsyncadd [#allocation5], %s1041
          %s1043 = smul.addr %s1039, 128
          %s1044 = scalar_lea.hbm %s5, %s1043
          %s1045 = sshll.u32 [#allocation11], 4
          %s1046 = int_to_ptr.vmem [resolvable:$true] %s1045
          %1051 = dma.vmem_to_hbm [thread:$0]  %s1046, 2048, %s1044, [#allocation5], 128, 128, 8
        $region68: #{tpu_custom_call.1} parent=39 // pred_fallthru
          _
        // Predicated region
        $region69: #{tpu_custom_call.1} parent=39 // pred_check
          %p1052 = pneg %p179
        $region70: #{tpu_custom_call.1} parent=39 // pred_check_branch
          %1054 = sbr.rel (%p1052) target = $region72
        $region71: #{tpu_custom_call.1} parent=39 // pred_region
          %1055 = dma.done [#allocation5], 2048
        $region72: #{tpu_custom_call.1} parent=39 // pred_fallthru
          _
      $region40: #{tpu_custom_call.1} parent=5 // pred_fallthru
        _
      %p1056 = scmp.le.s32.totalorder 2, %s19
      // Predicated region
      $region73: #{tpu_custom_call.1} parent=5 // pred_check
        %p1057 = pneg %p1056
      $region74: #{tpu_custom_call.1} parent=5 // pred_check_branch
        %1059 = sbr.rel (%p1057) target = $region76
      $region75: #{tpu_custom_call.1} parent=5 // pred_region
        %s1060 = ssub.s32 %s19, 2
      $region76: #{tpu_custom_call.1} parent=5 // pred_fallthru
        _
    $region6: #{tpu_custom_call.1} parent=1 // loop_footer
      %s23 = sadd.s32 1, %s19
    $region7: #{tpu_custom_call.1} parent=1 // loop_footer_branch
      %18 = sbr.rel target = $region3
    $region8: #{tpu_custom_call.1} parent=1 // loop_exit
      _
    %1061 = vsyncpa [#allocation4], 1
    %s1062 = scalar_lea.sflag [#allocation4], 1
    %1063 = vsyncpa %s1062, 1
    %1064 = vsyncpa [#allocation7], 1
    %s1065 = scalar_lea.sflag [#allocation7], 1
    %1066 = vsyncpa %s1065, 1
    %1067 = vsyncpa [#allocation10], 1
    %s1068 = scalar_lea.sflag [#allocation10], 1
    %1069 = vsyncpa %s1068, 1
    %1070 = vsyncpa [#allocation5], 1
    %s1071 = scalar_lea.sflag [#allocation5], 1
    %1072 = vsyncpa %s1071, 1

</llo_original>
